<compile_context>
chip_gen: v7x
topology: tpu7x:2x2x1
jax: 0.10.0
libtpu: 0.0.40
codegen_flags: <defaults>
</compile_context>

<pallas_src>
import functools

import jax
import jax.numpy as jnp
import numpy as np
from jax.experimental import pallas as pl
from jax.experimental.pallas import tpu as pltpu


def _atten_kernel(feat_ref, filt_ref, w_ref, b_ref, c_ref, out_ref, *,
                  normalize, inv_spatial):
    # feat_ref / filt_ref: (Bn, C, S) native dtype; w_ref: (1, C, 1) f32 VMEM;
    # b_ref: (1,) f32 SMEM scalar; c_ref: (Bn, S); out_ref: (Bn, C).
    feat = feat_ref[...].astype(jnp.float32)                 # (Bn, C, S)
    z = feat + filt_ref[...].astype(jnp.float32)             # (Bn, C, S)

    # 1x1 conv with out_channels=1 == weighted sum over channels + bias.
    # Done on the VPU (broadcast multiply) + small sublane (XLU) reduce.
    c = jnp.sum(z * w_ref[...].astype(jnp.float32), axis=1) + b_ref[0]  # (Bn, S)
    c_ref[...] = c.astype(c_ref.dtype)                       # dense (Bn, S) store

    if normalize:
        # Softmax over the spatial (lane) axis; normalization is deferred to
        # the small (Bn, C) pooled result instead of materializing `nor`.
        m = jnp.max(c, axis=-1, keepdims=True)               # (Bn, 1)
        p = jnp.exp(c - m)                                    # (Bn, S)
        l = jnp.sum(p, axis=-1, keepdims=True)                # (Bn, 1)
        pooled = jnp.sum(feat * p[:, None, :], axis=-1)       # (Bn, C)
        pooled = pooled * pl.reciprocal(l, approx=False)      # exact: keeps 1e-5 tol
    else:
        nor = jax.nn.sigmoid(c)                               # (Bn, S)
        pooled = jnp.sum(feat * nor[:, None, :], axis=-1) * inv_spatial

    out_ref[...] = pooled.astype(out_ref.dtype)


def _vmem_capacity_bytes():
    """Per-generation VMEM capacity (128 MiB v5e/v6e, 64 MiB per-TC v7x)."""
    try:
        return int(pltpu.get_tpu_info().vmem_capacity_bytes)
    except Exception:
        return 64 * 1024 * 1024        # conservative fallback (fits every gen)


def _choose_block_n(n, row_bytes, budget_bytes):
    """Pick the batch-block size Bn from an accurate per-row VMEM footprint."""
    bn = max(1, int(budget_bytes // max(row_bytes, 1)))
    bn = min(bn, n)
    # Keep several grid steps on larger batches so both v7x TensorCores get
    # balanced work (and per-step overhead still amortizes over a big tile).
    if n >= 32:
        bn = min(bn, pl.cdiv(n, 4))
    elif n >= 16:
        bn = min(bn, pl.cdiv(n, 2))
    if bn == n:
        return bn                       # full-batch block: always layout-legal
    if bn >= 8:
        return (bn // 8) * 8            # 8-aligned sublanes -> dense c/pooled stores
    # Pathological per-row footprint (huge C*S): take whatever fits; output
    # stores lose 8-sublane density but VMEM stays bounded.
    return max(1, bn)


def atten_block(feat, filter_, weight, bias, *, normalize=True, block_n=None,
                vmem_limit_bytes=None):
    """feat, filter_: (N, C, W, H); weight: (1, C, 1, 1); bias: (1,)."""
    N, C, W, H = feat.shape
    S = W * H
    out_dtype = feat.dtype

    # Flatten spatial onto the 128-lane axis.  No padding and no dtype copies:
    # the kernel streams native-dtype tensors and casts to f32 in-register
    # (safe on v5e too, which lacks bf16 VALU/EUP).
    feat_f = feat.reshape(N, C, S)
    filt_f = filter_.reshape(N, C, S)
    w = weight.reshape(1, C, 1).astype(jnp.float32)
    b = bias.reshape(1).astype(jnp.float32)

    in_isz = jnp.dtype(feat.dtype).itemsize
    out_isz = jnp.dtype(out_dtype).itemsize
    c_sub = ((C + 7) // 8) * 8              # sublane-padded channel dim
    c_lane = ((C + 127) // 128) * 128       # lane-padded channel dim (pooled tile)
    s_lane = ((S + 127) // 128) * 128       # lane-padded spatial dim

    # Per-batch-row VMEM bytes: 2 inputs x 2 pipeline buffers, plus the
    # double-buffered c and pooled output tiles.
    row_bytes = 2 * 2 * c_sub * s_lane * in_isz     # feat + filter_
    row_bytes += 2 * s_lane * out_isz               # c (dense 2-D)
    row_bytes += 2 * c_lane * out_isz               # pooled
    const_bytes = 2 * c_sub * 128 * 4 + (1 << 20)   # weight tile + slack

    vmem_cap = _vmem_capacity_bytes()
    budget = vmem_cap * 3 // 4 - const_bytes        # headroom for compiler scratch

    if block_n is None:
        Bn = _choose_block_n(N, row_bytes, budget)
    else:
        Bn = max(1, min(int(block_n), N))

    if vmem_limit_bytes is None:
        footprint = Bn * row_bytes + const_bytes
        vmem_limit_bytes = int(min(vmem_cap, max(32 << 20, footprint + (8 << 20))))

    kernel = functools.partial(_atten_kernel, normalize=normalize,
                               inv_spatial=1.0 / float(S))

    c_flat, pooled = pl.pallas_call(
        kernel,
        out_shape=(
            jax.ShapeDtypeStruct((N, S), out_dtype),
            jax.ShapeDtypeStruct((N, C), out_dtype),
        ),
        grid_spec=pltpu.PrefetchScalarGridSpec(
            num_scalar_prefetch=0,
            grid=(pl.cdiv(N, Bn),),
            in_specs=[
                pl.BlockSpec((Bn, C, S), lambda n: (n, 0, 0)),      # feat
                pl.BlockSpec((Bn, C, S), lambda n: (n, 0, 0)),      # filter_
                pl.BlockSpec((1, C, 1), lambda n: (0, 0, 0)),       # conv weight
                pl.BlockSpec(memory_space=pltpu.MemorySpace.SMEM),  # conv bias
            ],
            out_specs=[
                pl.BlockSpec((Bn, S), lambda n: (n, 0)),            # c (dense)
                pl.BlockSpec((Bn, C), lambda n: (n, 0)),            # pooled
            ],
        ),
        compiler_params=pltpu.CompilerParams(
            dimension_semantics=("parallel",),
            vmem_limit_bytes=vmem_limit_bytes,
        ),
    )(feat_f, filt_f, w, b)

    return c_flat.reshape(N, 1, W, H), pooled


def _reference(feat, filter_, weight, bias, normalize=True):
    """Pure JAX reference mirroring the PyTorch forward."""
    N, C, W, H = feat.shape
    z = feat + filter_
    w = weight.reshape(1, C)
    c = jnp.einsum("oc,ncwh->nowh", w, z) + bias.reshape(1, 1, 1, 1)   # (N,1,W,H)
    if normalize:
        nor = jax.nn.softmax(c.reshape(N, 1, -1), axis=2).reshape(N, 1, W, H)
        out = (nor * feat).reshape(N, C, -1).sum(axis=2)
    else:
        nor = jax.nn.sigmoid(c)
        out = (nor * feat).reshape(N, C, -1).mean(axis=2)
    return c, out


if __name__ == "__main__":
    key = jax.random.PRNGKey(0)
    k1, k2, k3, k4 = jax.random.split(key, 4)

    N, C, W, H = 2, 4, 16, 16
    feat = jax.random.normal(k1, (N, C, W, H), dtype=jnp.float32)
    filter_ = jax.random.normal(k2, (N, C, W, H), dtype=jnp.float32)

    # Deterministic parameter init (Conv2d(in_dim=C, out_channels=1, k=1)).
    weight = jax.random.normal(k3, (1, C, 1, 1), dtype=jnp.float32) * 0.1
    bias = jax.random.normal(k4, (1,), dtype=jnp.float32) * 0.1

    # normalize=True (default path)
    c_out, pooled = atten_block(feat, filter_, weight, bias, normalize=True)
    c_out, pooled = jax.block_until_ready((c_out, pooled))
    c_ref, pooled_ref = _reference(feat, filter_, weight, bias, normalize=True)
    np.testing.assert_allclose(np.asarray(c_out), np.asarray(c_ref),
                               rtol=1e-5, atol=1e-5)
    np.testing.assert_allclose(np.asarray(pooled), np.asarray(pooled_ref),
                               rtol=1e-5, atol=1e-5)
    assert c_out.shape == (N, 1, W, H) and pooled.shape == (N, C)

    # normalize=False path (sigmoid + spatial mean)
    c_out2, pooled2 = atten_block(feat, filter_, weight, bias, normalize=False)
    c_out2, pooled2 = jax.block_until_ready((c_out2, pooled2))
    c_ref2, pooled_ref2 = _reference(feat, filter_, weight, bias, normalize=False)
    np.testing.assert_allclose(np.asarray(c_out2), np.asarray(c_ref2),
                               rtol=1e-5, atol=1e-5)
    np.testing.assert_allclose(np.asarray(pooled2), np.asarray(pooled_ref2),
                               rtol=1e-5, atol=1e-5)

    # larger batch exercising the multi-step grid (Bn = 8, 2 steps)
    N2 = 16
    kk1, kk2 = jax.random.split(k1)
    feat_b = jax.random.normal(kk1, (N2, C, W, H), dtype=jnp.float32)
    filt_b = jax.random.normal(kk2, (N2, C, W, H), dtype=jnp.float32)
    c_b, p_b = atten_block(feat_b, filt_b, weight, bias, normalize=True)
    c_b, p_b = jax.block_until_ready((c_b, p_b))
    c_br, p_br = _reference(feat_b, filt_b, weight, bias, normalize=True)
    np.testing.assert_allclose(np.asarray(c_b), np.asarray(c_br),
                               rtol=1e-5, atol=1e-5)
    np.testing.assert_allclose(np.asarray(p_b), np.asarray(p_br),
                               rtol=1e-5, atol=1e-5)

    # ragged spatial size (S = 81, not a multiple of 128): handled without any
    # wrapper-side padding; Mosaic masks the padded lanes in the reductions.
    W3, H3 = 9, 9
    kr1, kr2 = jax.random.split(k2)
    feat_r = jax.random.normal(kr1, (N, C, W3, H3), dtype=jnp.float32)
    filt_r = jax.random.normal(kr2, (N, C, W3, H3), dtype=jnp.float32)
    c_r, p_r = atten_block(feat_r, filt_r, weight, bias, normalize=True)
    c_r, p_r = jax.block_until_ready((c_r, p_r))
    c_rr, p_rr = _reference(feat_r, filt_r, weight, bias, normalize=True)
    np.testing.assert_allclose(np.asarray(c_r), np.asarray(c_rr),
                               rtol=1e-5, atol=1e-5)
    np.testing.assert_allclose(np.asarray(p_r), np.asarray(p_rr),
                               rtol=1e-5, atol=1e-5)

    print("KERNEL_OK")
</pallas_src>

<mosaic_0001>
module attributes {stable_mosaic.version = 11 : i64} {
  func.func @_atten_kernel(%arg0: i32, %arg1: memref<2x4x256xf32, #tpu.memory_space<vmem>>, %arg2: memref<2x4x256xf32, #tpu.memory_space<vmem>>, %arg3: memref<1x4x1xf32, #tpu.memory_space<vmem>>, %arg4: memref<1xf32, #tpu.memory_space<smem>>, %arg5: memref<2x256xf32, #tpu.memory_space<vmem>>, %arg6: memref<2x4xf32, #tpu.memory_space<vmem>>) attributes {dimension_semantics = [#tpu.dimension_semantics<parallel>], iteration_bounds = array<i64: 1>, scalar_prefetch = 0 : i64, scratch_operands = 0 : i64, tpu.core_type = #tpu.core_type<tc>, window_params = [{transform_indices = @transform_0, window_bounds = array<i64: 2, 4, 256>}, {transform_indices = @transform_1, window_bounds = array<i64: 2, 4, 256>}, {pipeline_mode = #tpu.pipeline_mode<synchronous>, transform_indices = @transform_2, window_bounds = array<i64: 1, 4, 1>}, {transform_indices = @transform_3, window_bounds = array<i64: 1>}, {transform_indices = @transform_4, window_bounds = array<i64: 2, 256>}, {transform_indices = @transform_5, window_bounds = array<i64: 2, 4>}]} {
    %c0 = arith.constant 0 : index
    %c0_0 = arith.constant 0 : index
    %c0_1 = arith.constant 0 : index
    %0 = vector.load %arg1[%c0, %c0_0, %c0_1] : memref<2x4x256xf32, #tpu.memory_space<vmem>>, vector<2x4x256xf32>
    %c0_2 = arith.constant 0 : index
    %c0_3 = arith.constant 0 : index
    %c0_4 = arith.constant 0 : index
    %1 = vector.load %arg2[%c0_2, %c0_3, %c0_4] : memref<2x4x256xf32, #tpu.memory_space<vmem>>, vector<2x4x256xf32>
    %2 = arith.addf %0, %1 : vector<2x4x256xf32>
    %c0_5 = arith.constant 0 : index
    %c0_6 = arith.constant 0 : index
    %c0_7 = arith.constant 0 : index
    %3 = vector.load %arg3[%c0_5, %c0_6, %c0_7] : memref<1x4x1xf32, #tpu.memory_space<vmem>>, vector<1x4x1xf32>
    %4 = vector.broadcast %3 : vector<1x4x1xf32> to vector<2x4x256xf32>
    %5 = arith.mulf %2, %4 : vector<2x4x256xf32>
    %cst = arith.constant dense<0.000000e+00> : vector<2x256xf32>
    %6 = vector.multi_reduction <add>, %5, %cst [1] : vector<2x4x256xf32> to vector<2x256xf32>
    %c0_8 = arith.constant 0 : index
    %7 = memref.load %arg4[%c0_8] : memref<1xf32, #tpu.memory_space<smem>>
    %8 = vector.broadcast %7 : f32 to vector<2x256xf32>
    %9 = arith.addf %6, %8 : vector<2x256xf32>
    %c0_9 = arith.constant 0 : index
    %c0_10 = arith.constant 0 : index
    %10 = vector.load %arg5[%c0_9, %c0_10] : memref<2x256xf32, #tpu.memory_space<vmem>>, vector<2x256xf32>
    tpu.vector_store %arg5[%c0_9, %c0_10], %9 {strides = array<i32>} : memref<2x256xf32, #tpu.memory_space<vmem>>, vector<2x256xf32>,
    %cst_11 = arith.constant dense<0xFF800000> : vector<2xf32>
    %11 = vector.multi_reduction <maximumf>, %9, %cst_11 [1] : vector<2x256xf32> to vector<2xf32>
    %12 = vector.shape_cast %11 : vector<2xf32> to vector<2x1xf32>
    %13 = vector.broadcast %12 : vector<2x1xf32> to vector<2x256xf32>
    %14 = arith.subf %9, %13 : vector<2x256xf32>
    %15 = math.exp %14 : vector<2x256xf32>
    %cst_12 = arith.constant dense<0.000000e+00> : vector<2xf32>
    %16 = vector.multi_reduction <add>, %15, %cst_12 [1] : vector<2x256xf32> to vector<2xf32>
    %17 = vector.shape_cast %16 : vector<2xf32> to vector<2x1xf32>
    %18 = vector.shape_cast %15 : vector<2x256xf32> to vector<2x1x256xf32>
    %19 = vector.broadcast %18 : vector<2x1x256xf32> to vector<2x4x256xf32>
    %20 = arith.mulf %0, %19 : vector<2x4x256xf32>
    %cst_13 = arith.constant dense<0.000000e+00> : vector<2x4xf32>
    %21 = vector.multi_reduction <add>, %20, %cst_13 [2] : vector<2x4x256xf32> to vector<2x4xf32>
    %22 = tpu.reciprocal %17 : vector<2x1xf32> -> vector<2x1xf32>
    %23 = vector.broadcast %22 : vector<2x1xf32> to vector<2x4xf32>
    %24 = arith.mulf %21, %23 : vector<2x4xf32>
    %c0_14 = arith.constant 0 : index
    %c0_15 = arith.constant 0 : index
    %25 = vector.load %arg6[%c0_14, %c0_15] : memref<2x4xf32, #tpu.memory_space<vmem>>, vector<2x4xf32>
    tpu.vector_store %arg6[%c0_14, %c0_15], %24 {strides = array<i32>} : memref<2x4xf32, #tpu.memory_space<vmem>>, vector<2x4xf32>,
    return
  }
  func.func @transform_0(%arg0: i32) -> (i32, i32, i32) {
    %c0_i32 = arith.constant 0 : i32
    %c0_i32_0 = arith.constant 0 : i32
    %c0_i32_1 = arith.constant 0 : i32
    return %arg0, %c0_i32, %c0_i32_0 : i32, i32, i32
  }
  func.func @transform_1(%arg0: i32) -> (i32, i32, i32) {
    %c0_i32 = arith.constant 0 : i32
    %c0_i32_0 = arith.constant 0 : i32
    %c0_i32_1 = arith.constant 0 : i32
    return %arg0, %c0_i32, %c0_i32_0 : i32, i32, i32
  }
  func.func @transform_2(%arg0: i32) -> (i32, i32, i32) {
    %c0_i32 = arith.constant 0 : i32
    %c0_i32_0 = arith.constant 0 : i32
    %c0_i32_1 = arith.constant 0 : i32
    %c0_i32_2 = arith.constant 0 : i32
    return %c0_i32, %c0_i32_0, %c0_i32_1 : i32, i32, i32
  }
  func.func @transform_3(%arg0: i32) -> i32 {
    %c0_i32 = arith.constant 0 : i32
    %c0_i32_0 = arith.constant 0 : i32
    return %c0_i32 : i32
  }
  func.func @transform_4(%arg0: i32) -> (i32, i32) {
    %c0_i32 = arith.constant 0 : i32
    %c0_i32_0 = arith.constant 0 : i32
    return %arg0, %c0_i32 : i32, i32
  }
  func.func @transform_5(%arg0: i32) -> (i32, i32) {
    %c0_i32 = arith.constant 0 : i32
    %c0_i32_0 = arith.constant 0 : i32
    return %arg0, %c0_i32 : i32, i32
  }
}

</mosaic_0001>

<llo_original>
// kernel: tpu_custom_call.1
$region0: #{tpu_custom_call.1}
  #allocation0 [shape = 'u32[]', space=smem, size = 0x4, offset = 0x4, fixed_abs, tag = 'smem constant byte address 0x4 - core index']
  #allocation1 [shape = 'u32[144,128]{1,0:T(1,128)}', space=vmem, size = 0x12000, scoped, tag = 'internal scratch']
  #allocation2 [shape = 'f32[1]{0:T(128)S(6)}', space=smem, size = 0x200, scoped, tag = 'scoped memory for tpu_custom_call.1']
  %s0 = inlined_call_operand.hbm [shape: f32[2,4,256], index: 0, kind: input, shape index: {}]
  %s1 = inlined_call_operand.hbm [shape: f32[2,4,256], index: 1, kind: input, shape index: {}]
  %s2 = inlined_call_operand.vmem [shape: f32[1,4,1], index: 2, kind: input, shape index: {}]
  %s3 = inlined_call_operand.<no memory space> [shape: f32[1], index: 3, kind: input, shape index: {}]
  %s4 = inlined_call_operand.hbm [shape: f32[2,256], index: 4, kind: output, shape index: {0}]
  %s5 = inlined_call_operand.hbm [shape: f32[2,4], index: 5, kind: output, shape index: {1}]
  %6 = xla_tuple %s4, %s5
  %s7 = sld [smem:[#allocation0]]
  $region42: #{tpu_custom_call.1} parent=0
    _
  %s9 = ssub.s32 1, %s7
  %s10 = scalar_select 0, %s9, %s7
  %11 = sst [smem:[#allocation2]] %s3
  $region1: #{tpu_custom_call.1} parent=0
    #allocation3 [shape = 'u8[8192]{0}', space=vmem, size = 0x2000, scoped, tag = 'input window, operand 0, single buffered']
    #allocation4 [shape = 's32[1]{0}', space=sflag, size = 0x4, scoped, tag = 'scoped memory for tpu_custom_call.1']
    #allocation5 [shape = 's32[1]{0}', space=sflag, size = 0x4, scoped, tag = 'scoped memory for tpu_custom_call.1']
    #allocation6 [shape = 'u8[8192]{0}', space=vmem, size = 0x2000, scoped, tag = 'input window, operand 1, single buffered']
    #allocation7 [shape = 's32[1]{0}', space=sflag, size = 0x4, scoped, tag = 'scoped memory for tpu_custom_call.1']
    #allocation8 [shape = 'u8[2048]{0}', space=vmem, size = 0x800, scoped, tag = 'output window, operand 0, single buffered']
    #allocation9 [shape = 'u8[1024]{0}', space=vmem, size = 0x400, scoped, tag = 'output window, operand 1, single buffered']
    #allocation10 [shape = 's32[1]{0}', space=sflag, size = 0x4, scoped, tag = 'scoped memory for tpu_custom_call.1']
    %12 = vsyncpa [#allocation4], 0
    %13 = vsyncpa [#allocation7], 0
    %14 = vsyncpa [#allocation5], 0
    %15 = vsyncpa [#allocation10], 0
    // Predicated region
    $region2: #{tpu_custom_call.1} parent=1 // pred_check
      _
    $region3: #{tpu_custom_call.1} parent=1 // pred_check_branch
      %17 = sbr.rel (0) target = $region5
    $region4: #{tpu_custom_call.1} parent=1 // pred_region
      %s19 = ssub.s32 256, 256
      %20 = vsyncadd [#allocation4], %s19
      %s21 = sshll.u32 [#allocation3], 4
      %s22 = int_to_ptr.vmem [resolvable:$true] %s21
      %27 = dma.hbm_to_vmem [thread:$0]  %s0, 256, %s22, [#allocation4], 128, 128, 8
    $region5: #{tpu_custom_call.1} parent=1 // pred_fallthru
      _
    // Predicated region
    $region6: #{tpu_custom_call.1} parent=1 // pred_check
      _
    $region7: #{tpu_custom_call.1} parent=1 // pred_check_branch
      %29 = sbr.rel (0) target = $region9
    $region8: #{tpu_custom_call.1} parent=1 // pred_region
      %s31 = ssub.s32 256, 256
      %32 = vsyncadd [#allocation7], %s31
      %s33 = sshll.u32 [#allocation6], 4
      %s34 = int_to_ptr.vmem [resolvable:$true] %s33
      %39 = dma.hbm_to_vmem [thread:$0]  %s1, 256, %s34, [#allocation7], 128, 128, 8
    $region9: #{tpu_custom_call.1} parent=1 // pred_fallthru
      _
    // Predicated region
    $region10: #{tpu_custom_call.1} parent=1 // pred_check
      _
    $region11: #{tpu_custom_call.1} parent=1 // pred_check_branch
      %41 = sbr.rel (0) target = $region13
    $region12: #{tpu_custom_call.1} parent=1 // pred_region
      _
    $region13: #{tpu_custom_call.1} parent=1 // pred_fallthru
      _
    // Predicated region
    $region14: #{tpu_custom_call.1} parent=1 // pred_check
      _
    $region15: #{tpu_custom_call.1} parent=1 // pred_check_branch
      %43 = sbr.rel (0) target = $region17
    $region16: #{tpu_custom_call.1} parent=1 // pred_region
      _
    $region17: #{tpu_custom_call.1} parent=1 // pred_fallthru
      _
    // Predicated region
    $region18: #{tpu_custom_call.1} parent=1 // pred_check
      _
    $region19: #{tpu_custom_call.1} parent=1 // pred_check_branch
      %45 = sbr.rel (0) target = $region21
    $region20: #{tpu_custom_call.1} parent=1 // pred_region
      %46 = dma.done [#allocation4], 256
    $region21: #{tpu_custom_call.1} parent=1 // pred_fallthru
      _
    // Predicated region
    $region22: #{tpu_custom_call.1} parent=1 // pred_check
      _
    $region23: #{tpu_custom_call.1} parent=1 // pred_check_branch
      %48 = sbr.rel (0) target = $region25
    $region24: #{tpu_custom_call.1} parent=1 // pred_region
      %49 = dma.done [#allocation7], 256
    $region25: #{tpu_custom_call.1} parent=1 // pred_fallthru
      _
    %v50 = vld [vmem:[#allocation3] sm:$0xff]
    %v51 = vld [vmem:[#allocation3 + $0x8] sm:$0xff]
    %v52 = vld [vmem:[#allocation6] sm:$0xff]
    %v53 = vld [vmem:[#allocation6 + $0x8] sm:$0xff]
    %v54 = vadd.f32 %v50, %v52
    %v55 = vadd.f32 %v51, %v53
    %v56 = vld [vmem:[%s2] sm:$0xf]
    %58 = vset.pattern.permute.xlu0 0
    %59 = vperm.xlu0 %58, %v56
    %v60 = vpop.permute.xlu0 %59
    %v62 = vunpack.c.l.s4 839922192
    %v63 = vunpack.c.0.s8 %v62
    %v64 = vlaneseq
    %v65 = vshrl.u32 %v64, 7
    %v66 = vsub.s32 %v63, %v65
    %v67 = vrot.slane %v60, %v66
    %v69 = vmul.f32 %v54, %v67
    %v70 = vmul.f32 %v55, %v67
    %v73 = vcombine.high %v69, %v69
    %v74 = vcombine.high %v70, %v70
    %vm77 = vcmask 1043456
    %v78 = vsel %vm77, %v69, 0.0
    %v79 = vrot.slane %v78, 4
    %v80 = vadd.f32 %v78, %v79
    %v81 = vrot.slane %v80, 2
    %v82 = vadd.f32 %v80, %v81
    %v83 = vrot.slane %v82, 1
    %v84 = vadd.f32 %v82, %v83
    %v85 = vsel %vm77, %v73, 0.0
    %v86 = vrot.slane %v85, 4
    %v87 = vadd.f32 %v85, %v86
    %v88 = vrot.slane %v87, 2
    %v89 = vadd.f32 %v87, %v88
    %v90 = vrot.slane %v89, 1
    %v91 = vadd.f32 %v89, %v90
    %v92 = vsel %vm77, %v70, 0.0
    %v93 = vrot.slane %v92, 4
    %v94 = vadd.f32 %v92, %v93
    %v95 = vrot.slane %v94, 2
    %v96 = vadd.f32 %v94, %v95
    %v97 = vrot.slane %v96, 1
    %v98 = vadd.f32 %v96, %v97
    %v99 = vsel %vm77, %v74, 0.0
    %v100 = vrot.slane %v99, 4
    %v101 = vadd.f32 %v99, %v100
    %v102 = vrot.slane %v101, 2
    %v103 = vadd.f32 %v101, %v102
    %v104 = vrot.slane %v103, 1
    %v105 = vadd.f32 %v103, %v104
    %s106 = sld [smem:[#allocation2]]
    %v107 = vstv %s106
    %v108 = vadd.f32 %v84, %v107
    %v109 = vadd.f32 %v91, %v107
    %v110 = vadd.f32 %v98, %v107
    %v111 = vadd.f32 %v105, %v107
    %v116 = vcombine.low %v108, %v109
    %v118 = vunpack.c.l.s4 1983009808
    %v119 = vunpack.c.0.s8 %v118
    %v120 = vlaneseq
    %v121 = vshrl.u32 %v120, 7
    %v122 = vsub.s32 %v119, %v121
    %v123 = vrot.slane %v116, %v122
    %v124 = vcombine.low %v110, %v111
    %v126 = vunpack.c.l.s4 1983009808
    %v127 = vunpack.c.0.s8 %v126
    %v128 = vlaneseq
    %v129 = vshrl.u32 %v128, 7
    %v130 = vsub.s32 %v127, %v129
    %v131 = vrot.slane %v124, %v130
    %vm132 = vcmask 1044484
    %v133 = vsel %vm132, %v123, %v123
    %vm134 = vcmask 1046534
    %v135 = vsel %vm134, %v123, %v133
    %v136 = vrot.slane %v131, 7
    %vm137 = vcmask 1041409
    %v138 = vsel %vm137, %v136, %v135
    %vm139 = vcmask 1043459
    %v140 = vsel %vm139, %v136, %v138
    %vm141 = vcmask 1045509
    %v142 = vsel %vm141, %v136, %v140
    %vm143 = vcmask 1047559
    %v144 = vsel %vm143, %v136, %v142
    %146 = vst [vmem:[#allocation8] sm:$0xf] %v144
    %v147 = vsel %vm137, %v110, %v108
    %v148 = vsel %vm137, %v111, %v109
    %vm151 = vcmask 1041408
    %v152 = vsel %vm151, %v147, -inf
    %v153 = vsel %vm151, %v148, -inf
    %v154 = vmax.f32 %v152, %v153
    %155 = vmax.xlane.f32.xlu0 %v154
    %v156 = vpop.xlane.xlu0 %155
    %v158 = vrot.slane %v156, 1
    %v161 = vsub.f32 %v108, %v156
    %v162 = vsub.f32 %v109, %v156
    %v163 = vsub.f32 %v110, %v158
    %v164 = vsub.f32 %v111, %v158
    %v165 = vmul.f32 %v161, 1.442695
    %v166 = vpow.pop %v165
    %v167 = vmul.f32 %v162, 1.442695
    %v168 = vpow.pop %v167
    %v169 = vmul.f32 %v163, 1.442695
    %v170 = vpow.pop %v169
    %v171 = vmul.f32 %v164, 1.442695
    %v172 = vpow.pop %v171
    %v177 = vrot.slane %v170, 7
    %v178 = vsel %vm137, %v177, %v166
    %v179 = vrot.slane %v172, 7
    %v180 = vsel %vm137, %v179, %v168
    %v183 = vsel %vm151, %v178, 0.0
    %v184 = vsel %vm151, %v180, 0.0
    %v185 = vadd.f32 %v183, %v184
    %186 = vadd.xlane.f32.xlu0 %v185
    %v187 = vpop.xlane.xlu0 %186
    %v188 = vlaneseq
    %v189 = vshrl.u32 %v188, 7
    %v190 = vsub.s32 0, %v189
    %v191 = vrot.slane %v166, %v190
    %v192 = vlaneseq
    %v193 = vshrl.u32 %v192, 7
    %v194 = vsub.s32 0, %v193
    %v195 = vrot.slane %v168, %v194
    %v196 = vlaneseq
    %v197 = vshrl.u32 %v196, 7
    %v198 = vsub.s32 0, %v197
    %v199 = vrot.slane %v170, %v198
    %v200 = vlaneseq
    %v201 = vshrl.u32 %v200, 7
    %v202 = vsub.s32 0, %v201
    %v203 = vrot.slane %v172, %v202
    %v208 = vcombine.low %v191, %v195
    %v209 = vcombine.low %v199, %v203
    %v212 = vmul.f32 %v50, %v208
    %v213 = vmul.f32 %v51, %v209
    %v216 = vcombine.high %v212, %v212
    %v217 = vcombine.high %v213, %v213
    %v220 = vsel %vm77, %v212, 0.0
    %v221 = vsel %vm77, %v216, 0.0
    %v222 = vadd.f32 %v220, %v221
    %223 = vadd.xlane.f32.xlu0 %v222
    %v224 = vpop.xlane.xlu0 %223
    %v225 = vsel %vm77, %v213, 0.0
    %v226 = vsel %vm77, %v217, 0.0
    %v227 = vadd.f32 %v225, %v226
    %228 = vadd.xlane.f32.xlu0 %v227
    %v229 = vpop.xlane.xlu0 %228
    %v230 = vrcp.pop %v187
    %v232 = vlaneseq
    %v233 = vshrl.u32 %v232, 7
    %v234 = vsub.s32 0, %v233
    %v235 = vrot.slane %v230, %v234
    %v236 = vlaneseq
    %v237 = vshrl.u32 %v236, 7
    %v238 = vsub.s32 1, %v237
    %v239 = vrot.slane %v230, %v238
    %v242 = vmul.f32 %v224, %v235
    %v243 = vmul.f32 %v229, %v239
    %246 = vset.pattern.permute.xlu0 0
    %247 = vperm.xlu0 %246, %v242
    %v248 = vpop.permute.xlu0 %247
    %249 = vset.pattern.permute.xlu0 0
    %250 = vperm.xlu0 %249, %v243
    %v251 = vpop.permute.xlu0 %250
    %v252 = vlaneseq
    %v253 = vand.u32 %v252, 127
    %v254 = vlaneseq
    %v255 = vshrl.u32 %v254, 7
    %v256 = vsub.s32 %v253, %v255
    %v257 = vrot.slane %v248, %v256
    %v258 = vlaneseq
    %v259 = vshrl.u32 %v258, 7
    %v260 = vsub.s32 %v253, %v259
    %v261 = vrot.slane %v251, %v260
    %v262 = vsel %vm137, %v261, %v257
    %vm264 = vcmask 25600
    %265 = vst.msk [vmem:[#allocation9] sm:$0x3] %vm264, %v262
    // Predicated region
    $region26: #{tpu_custom_call.1} parent=1 // pred_check
      _
    $region27: #{tpu_custom_call.1} parent=1 // pred_check_branch
      %267 = sbr.rel (0) target = $region29
    $region28: #{tpu_custom_call.1} parent=1 // pred_region
      %s269 = ssub.s32 64, 64
      %270 = vsyncadd [#allocation5], %s269
      %s272 = sshll.u32 [#allocation8], 4
      %s273 = int_to_ptr.vmem [resolvable:$true] %s272
      %275 = dma.vmem_to_hbm [thread:$0]  %s273, 64, %s4, [#allocation5]
    $region29: #{tpu_custom_call.1} parent=1 // pred_fallthru
      _
    // Predicated region
    $region30: #{tpu_custom_call.1} parent=1 // pred_check
      _
    $region31: #{tpu_custom_call.1} parent=1 // pred_check_branch
      %277 = sbr.rel (0) target = $region33
    $region32: #{tpu_custom_call.1} parent=1 // pred_region
      %s279 = ssub.s32 32, 32
      %280 = vsyncadd [#allocation10], %s279
      %s282 = sshll.u32 [#allocation9], 4
      %s283 = int_to_ptr.vmem [resolvable:$true] %s282
      %285 = dma.vmem_to_hbm [thread:$0]  %s283, 32, %s5, [#allocation10]
    $region33: #{tpu_custom_call.1} parent=1 // pred_fallthru
      _
    // Predicated region
    $region34: #{tpu_custom_call.1} parent=1 // pred_check
      _
    $region35: #{tpu_custom_call.1} parent=1 // pred_check_branch
      %287 = sbr.rel (0) target = $region37
    $region36: #{tpu_custom_call.1} parent=1 // pred_region
      %288 = dma.done [#allocation5], 64
    $region37: #{tpu_custom_call.1} parent=1 // pred_fallthru
      _
    // Predicated region
    $region38: #{tpu_custom_call.1} parent=1 // pred_check
      _
    $region39: #{tpu_custom_call.1} parent=1 // pred_check_branch
      %290 = sbr.rel (0) target = $region41
    $region40: #{tpu_custom_call.1} parent=1 // pred_region
      %291 = dma.done [#allocation10], 32
    $region41: #{tpu_custom_call.1} parent=1 // pred_fallthru
      _
    %292 = vsyncpa [#allocation4], 1
    %293 = vsyncpa [#allocation7], 1
    %294 = vsyncpa [#allocation5], 1
    %295 = vsyncpa [#allocation10], 1

</llo_original>
